<compile_context>
chip_gen: v5e
topology: v5e:2x2
jax: 0.10.0
libtpu: 0.0.40
codegen_flags: <defaults>
</compile_context>

<pallas_src>
import functools

import jax
import jax.numpy as jnp
from jax import lax
from jax.experimental import pallas as pl
from jax.experimental.pallas import tpu as pltpu

_LANE = 128


def _round_up(x, m):
    return (x + m - 1) // m * m


def _vmem_capacity_bytes():
    # Generation-aware VMEM capacity (128 MiB on v5e/v6e, 64 MiB per TC on v7x).
    try:
        cap = int(pltpu.get_tpu_info().vmem_capacity_bytes)
        return max(cap, 16 << 20)
    except Exception:
        return 64 << 20  # conservative: assume the smallest generation (v7x)


# ---------------------------------------------------------------------------
# Fast path (small / moderate vocab): VMEM-resident table, one-hot MXU gather.
# ---------------------------------------------------------------------------
def _onehot_kernel(words_ref, mask_ref, w_ref, out_ref, *, precision):
    # words_ref : VMEM (TILE_N, 1) int32 -- word ids for this tile (clipped to [0, V-1])
    # mask_ref  : VMEM (1, V_pad)  f32   -- keep mask * 1/(1-p); 0 on padded vocab rows
    # w_ref     : VMEM (V_pad, D)        -- full (padded) table, resident across the grid
    # out_ref   : VMEM (TILE_N, D)
    tile_n = out_ref.shape[0]
    v_pad = w_ref.shape[0]

    ids = words_ref[...]                                        # (tile_n, 1), sublane-major
    iota = lax.broadcasted_iota(jnp.int32, (tile_n, v_pad), 1)  # vocab ids along lanes
    # One-hot row select fused with the dropout mask; runs on VPU, gather runs on MXU.
    onehot = jnp.where(iota == ids, mask_ref[...], 0.0).astype(w_ref.dtype)
    out = jnp.dot(onehot, w_ref[...],
                  preferred_element_type=jnp.float32, precision=precision)
    out_ref[...] = out.astype(out_ref.dtype)


def _embedding_dropout_onehot(weight, words_flat, mask_scaled, *, tile_n=256):
    V, D = weight.shape
    itemsize = weight.dtype.itemsize
    words_flat = jnp.clip(words_flat.astype(jnp.int32).reshape(-1), 0, V - 1)
    N = words_flat.shape[0]

    # Pad the vocab to a lane multiple (MXU-friendly contraction dim). Padded rows get
    # mask 0 and are never selected because ids are clipped to [0, V-1].
    v_pad = _round_up(V, _LANE)
    if v_pad != V:
        weight = jnp.pad(weight, ((0, v_pad - V), (0, 0)))
        mask_scaled = jnp.pad(mask_scaled, (0, v_pad - V))

    tile_n = min(tile_n, _round_up(N, 8))
    n_pad = _round_up(N, tile_n)
    if n_pad != N:
        words_flat = jnp.pad(words_flat, (0, n_pad - N))  # pad with id 0 (valid row)
    num_tiles = n_pad // tile_n

    words_col = words_flat.reshape(n_pad, 1)
    mask_row = mask_scaled.reshape(1, v_pad).astype(jnp.float32)

    table_bytes = v_pad * D * itemsize
    out_tile_bytes = tile_n * D * itemsize
    onehot_bytes = tile_n * v_pad * 4

    # Constant index_map => the table is only DMA'd once; single-buffer it when large so
    # it does not cost 2x table_bytes of VMEM. Small tables keep the default buffering.
    table_big = table_bytes > (4 << 20)
    if table_big:
        table_spec = pl.BlockSpec((v_pad, D), lambda i: (0, 0),
                                  pipeline_mode=pl.Buffered(1))
    else:
        table_spec = pl.BlockSpec((v_pad, D), lambda i: (0, 0))

    vmem_cap = _vmem_capacity_bytes()
    vmem_need = (table_bytes * (1 if table_big else 2)
                 + 2 * out_tile_bytes + 2 * onehot_bytes
                 + 2 * (tile_n * 4 + v_pad * 4) + (4 << 20))
    vmem_limit = int(min(vmem_cap, max(vmem_need, 32 << 20)))

    # Shard word tiles across TensorCores only when the gathered output dominates the
    # one-time table fetch ("parallel" on v7x makes each core fetch its own table copy).
    out_bytes = n_pad * D * itemsize
    semantics = ("parallel",) if out_bytes >= table_bytes else ("arbitrary",)

    precision = (jax.lax.Precision.HIGHEST if weight.dtype == jnp.float32
                 else jax.lax.Precision.DEFAULT)

    out = pl.pallas_call(
        functools.partial(_onehot_kernel, precision=precision),
        out_shape=jax.ShapeDtypeStruct((n_pad, D), weight.dtype),
        grid=(num_tiles,),
        in_specs=[
            pl.BlockSpec((tile_n, 1), lambda i: (i, 0)),   # word ids (VMEM column)
            pl.BlockSpec((1, v_pad), lambda i: (0, 0)),    # scaled keep mask (VMEM row)
            table_spec,                                    # resident embedding table
        ],
        out_specs=pl.BlockSpec((tile_n, D), lambda i: (i, 0)),
        compiler_params=pltpu.CompilerParams(
            dimension_semantics=semantics,
            vmem_limit_bytes=vmem_limit,
        ),
    )(words_col, mask_row, weight)
    return out[:N]


# ---------------------------------------------------------------------------
# Large-vocab path: table stays in HBM; batched, double-buffered per-row DMA gather.
# ---------------------------------------------------------------------------
def _gather_kernel(words_smem, w_hbm, maskw_ref, out_ref, vbuf, sem, *, tile_n):
    # words_smem: SMEM (n_pad,) int32 -- all word ids (scalar prefetch), n_pad % tile_n == 0
    # w_hbm     : ANY  (V, D)         -- embedding table left in HBM
    # maskw_ref : VMEM (tile_n, 1) f32 -- per-word scaled keep-mask values for this tile
    # out_ref   : VMEM (tile_n, D)
    # vbuf      : VMEM (2, tile_n, D) scratch -- double-buffered row landing zone
    # sem       : DMA semaphores (2,)
    t = pl.program_id(0)
    nt = pl.num_programs(0)
    slot = t % 2

    def issue(tile_idx, slot_idx):
        base = tile_idx * tile_n

        @pl.loop(0, tile_n)
        def _(j):
            row = words_smem[base + j]
            pltpu.make_async_copy(
                w_hbm.at[pl.ds(row, 1), :],
                vbuf.at[slot_idx, pl.ds(j, 1), :],
                sem.at[slot_idx],
            ).start()

    # Prime the pipeline on the first step.
    @pl.when(t == 0)
    def _():
        issue(0, 0)

    # Prefetch the next tile's rows into the other slot while this tile is consumed.
    @pl.when(t + 1 < nt)
    def _():
        issue(t + 1, 1 - slot)

    # Wait for this tile's row DMAs (descriptors only need matching shapes).
    @pl.loop(0, tile_n)
    def _(j):
        pltpu.make_async_copy(
            w_hbm.at[pl.ds(0, 1), :],
            vbuf.at[slot, pl.ds(j, 1), :],
            sem.at[slot],
        ).wait()

    out_ref[...] = (vbuf[slot] * maskw_ref[...]).astype(out_ref.dtype)


def _embedding_dropout_gather(weight, words_flat, mask_scaled, *, tile_n=64):
    V, D = weight.shape
    words_flat = jnp.clip(words_flat.astype(jnp.int32).reshape(-1), 0, V - 1)
    N = words_flat.shape[0]

    tile_n = min(tile_n, _round_up(N, 8))
    n_pad = _round_up(N, tile_n)
    if n_pad != N:
        words_flat = jnp.pad(words_flat, (0, n_pad - N))  # pad with id 0 (valid row)
    num_tiles = n_pad // tile_n

    # Per-word mask values are produced with a tiny XLA gather in the wrapper (N floats)
    # instead of scalar-prefetching the whole (V,) mask into SMEM (pow2-padding cliff).
    maskw = mask_scaled.astype(jnp.float32)[words_flat].reshape(n_pad, 1)

    # TODO(synk): the word-id scalar prefetch still pads to next_pow2(4*n_pad) bytes of
    # SMEM; chunk the call at the wrapper level for multi-100K-token streams.
    out = pl.pallas_call(
        functools.partial(_gather_kernel, tile_n=tile_n),
        out_shape=jax.ShapeDtypeStruct((n_pad, D), weight.dtype),
        grid_spec=pltpu.PrefetchScalarGridSpec(
            num_scalar_prefetch=1,
            grid=(num_tiles,),
            in_specs=[
                pl.BlockSpec(memory_space=pl.ANY),                  # table stays in HBM
                pl.BlockSpec((tile_n, 1), lambda i, wrds: (i, 0)),  # per-word mask (VMEM)
            ],
            out_specs=pl.BlockSpec((tile_n, D), lambda i, wrds: (i, 0)),
            scratch_shapes=[
                pltpu.VMEM((2, tile_n, D), weight.dtype),
                pltpu.SemaphoreType.DMA((2,)),
            ],
        ),
        compiler_params=pltpu.CompilerParams(
            # Cross-step double buffering requires sequential grid iteration.
            dimension_semantics=("arbitrary",),
        ),
    )(words_flat, weight, maskw)
    return out[:N]


# ---------------------------------------------------------------------------
# Public wrapper (matches EmbeddingDropout.forward).
# ---------------------------------------------------------------------------
def embedding_dropout(weight, words, keep_mask, p, training=True):
    """Pallas EmbeddingDropout forward.

    weight:    (V, D) float embedding table
    words:     integer id tensor, any shape
    keep_mask: (V,) float of {0., 1.} -- bernoulli(1-p) draws (ignored if not training)
    """
    V, D = weight.shape

    if (not training) or p == 0.0:
        # Eval / no-dropout: a plain XLA gather is strictly cheaper than any kernel.
        return weight[words]

    assert 0.0 <= p < 1.0, "dropout p must be in [0, 1) for training"
    mask_scaled = keep_mask.astype(jnp.float32) * jnp.float32(1.0 / (1.0 - p))

    words_flat = words.reshape(-1).astype(jnp.int32)
    N = words_flat.shape[0]

    itemsize = weight.dtype.itemsize
    table_bytes = V * D * itemsize
    gathered_bytes = N * D * itemsize
    v_pad = _round_up(V, _LANE)

    # One-hot MXU path only when: vocab is small/moderate (one-hot tile stays a few MiB),
    # the table fits the generation's VMEM budget, and streaming the whole table from HBM
    # once is not much more traffic than gathering only the needed rows.
    resident_budget = _vmem_capacity_bytes() // 2
    use_onehot = (
        v_pad <= 8192
        and table_bytes <= resident_budget
        and table_bytes <= max(4 * gathered_bytes, 2 << 20)
    )

    if use_onehot:
        out_flat = _embedding_dropout_onehot(weight, words_flat, mask_scaled)
    else:
        out_flat = _embedding_dropout_gather(weight, words_flat, mask_scaled)

    return out_flat.reshape(words.shape + (D,))


if __name__ == "__main__":
    key = jax.random.PRNGKey(0)
    k_w, k_ids, k_mask, k_ids2 = jax.random.split(key, 4)

    V, D = 64, 128        # small vocab, lane-aligned embedding dim
    B, T = 2, 8           # batch=2, seq=8
    p = 0.5

    weight = jax.random.normal(k_w, (V, D), dtype=jnp.float32)
    words = jax.random.randint(k_ids, (B, T), 0, V, dtype=jnp.int32)
    # The bernoulli row mask (embed.weight.new().bernoulli_(1-p) in PyTorch) is RNG glue;
    # the mask apply / rescale / gather happen inside the Pallas kernels.
    keep_mask = jax.random.bernoulli(k_mask, 1.0 - p, (V,)).astype(jnp.float32)

    # Pure-JAX reference of the PyTorch forward.
    masked_w = (keep_mask[:, None] / (1.0 - p)) * weight
    ref = masked_w[words]

    # Training path -> one-hot MXU resident-table kernel.
    out = jax.block_until_ready(embedding_dropout(weight, words, keep_mask, p, training=True))
    assert out.shape == (B, T, D), out.shape
    assert out.dtype == weight.dtype
    assert jnp.allclose(out, ref, atol=1e-5), "one-hot path mismatch vs reference"

    # Large-vocab fallback: double-buffered HBM row gather (multi-tile so the cross-step
    # prefetch / slot swap / padding logic is exercised), called directly.
    words_long = jax.random.randint(k_ids2, (3, 50), 0, V, dtype=jnp.int32)
    mask_scaled = keep_mask * jnp.float32(1.0 / (1.0 - p))
    out_fb = jax.block_until_ready(
        _embedding_dropout_gather(weight, words_long.reshape(-1), mask_scaled))
    assert jnp.allclose(out_fb, masked_w[words_long.reshape(-1)], atol=1e-5), \
        "gather path mismatch vs reference"

    # Eval path (training=False): plain lookup, kernel bypassed.
    out_eval = jax.block_until_ready(
        embedding_dropout(weight, words, keep_mask, p, training=False))
    assert jnp.allclose(out_eval, weight[words], atol=1e-6)

    print("KERNEL_OK")
</pallas_src>

<mosaic_0001>
module attributes {stable_mosaic.version = 11 : i64} {
  func.func @_onehot_kernel(%arg0: i32, %arg1: memref<16x1xi32, #tpu.memory_space<vmem>>, %arg2: memref<1x128xf32, #tpu.memory_space<vmem>>, %arg3: memref<128x128xf32, #tpu.memory_space<vmem>>, %arg4: memref<16x128xf32, #tpu.memory_space<vmem>>) attributes {dimension_semantics = [#tpu.dimension_semantics<arbitrary>], iteration_bounds = array<i64: 1>, scalar_prefetch = 0 : i64, scratch_operands = 0 : i64, tpu.core_type = #tpu.core_type<tc>, window_params = [{transform_indices = @transform_0, window_bounds = array<i64: 16, 1>}, {pipeline_mode = #tpu.pipeline_mode<synchronous>, transform_indices = @transform_1, window_bounds = array<i64: 1, 128>}, {pipeline_mode = #tpu.pipeline_mode<synchronous>, transform_indices = @transform_2, window_bounds = array<i64: 128, 128>}, {transform_indices = @transform_3, window_bounds = array<i64: 16, 128>}]} {
    %c0 = arith.constant 0 : index
    %c0_0 = arith.constant 0 : index
    %0 = vector.load %arg1[%c0, %c0_0] : memref<16x1xi32, #tpu.memory_space<vmem>>, vector<16x1xi32>
    %1 = tpu.iota {dimensions = array<i32: 1>} : vector<16x128xi32>
    %2 = vector.broadcast %0 : vector<16x1xi32> to vector<16x128xi32>
    %3 = arith.cmpi eq, %1, %2 : vector<16x128xi32>
    %c0_1 = arith.constant 0 : index
    %c0_2 = arith.constant 0 : index
    %4 = vector.load %arg2[%c0_1, %c0_2] : memref<1x128xf32, #tpu.memory_space<vmem>>, vector<1x128xf32>
    %cst = arith.constant 0.000000e+00 : f32
    %5 = vector.shape_cast %4 : vector<1x128xf32> to vector<1x128xf32>
    %6 = vector.broadcast %5 : vector<1x128xf32> to vector<16x128xf32>
    %7 = vector.broadcast %cst : f32 to vector<16x128xf32>
    %8 = arith.select %3, %6, %7 : vector<16x128xi1>, vector<16x128xf32>
    %c0_3 = arith.constant 0 : index
    %c0_4 = arith.constant 0 : index
    %9 = vector.load %arg3[%c0_3, %c0_4] : memref<128x128xf32, #tpu.memory_space<vmem>>, vector<128x128xf32>
    %cst_5 = arith.constant dense<0.000000e+00> : vector<16x128xf32>
    %10 = tpu.matmul %8, %9, %cst_5 {dimension_numbers = #tpu.dot_dimension_numbers<[1], [0], [0], [1], [0, 0, 1, 1], [], []>, precision = #tpu.contract_precision<fp32>} : vector<16x128xf32>, vector<128x128xf32>, vector<16x128xf32> -> vector<16x128xf32>
    %c0_6 = arith.constant 0 : index
    %c0_7 = arith.constant 0 : index
    %11 = vector.load %arg4[%c0_6, %c0_7] : memref<16x128xf32, #tpu.memory_space<vmem>>, vector<16x128xf32>
    tpu.vector_store %arg4[%c0_6, %c0_7], %10 {strides = array<i32>} : memref<16x128xf32, #tpu.memory_space<vmem>>, vector<16x128xf32>,
    return
  }
  func.func @transform_0(%arg0: i32) -> (i32, i32) {
    %c0_i32 = arith.constant 0 : i32
    %c0_i32_0 = arith.constant 0 : i32
    return %arg0, %c0_i32 : i32, i32
  }
  func.func @transform_1(%arg0: i32) -> (i32, i32) {
    %c0_i32 = arith.constant 0 : i32
    %c0_i32_0 = arith.constant 0 : i32
    %c0_i32_1 = arith.constant 0 : i32
    return %c0_i32, %c0_i32_0 : i32, i32
  }
  func.func @transform_2(%arg0: i32) -> (i32, i32) {
    %c0_i32 = arith.constant 0 : i32
    %c0_i32_0 = arith.constant 0 : i32
    %c0_i32_1 = arith.constant 0 : i32
    return %c0_i32, %c0_i32_0 : i32, i32
  }
  func.func @transform_3(%arg0: i32) -> (i32, i32) {
    %c0_i32 = arith.constant 0 : i32
    %c0_i32_0 = arith.constant 0 : i32
    return %arg0, %c0_i32 : i32, i32
  }
}

</mosaic_0001>

<llo_original>
// kernel: tpu_custom_call.1
$region0: #{tpu_custom_call.1}
  #allocation0 [shape = 'u32[]', space=smem, size = 0x4, offset = 0x4, fixed_abs, tag = 'smem constant byte address 0x4 - core index']
  #allocation1 [shape = 'u32[72,128]{1,0:T(1,128)}', space=vmem, size = 0x9000, scoped, tag = 'internal scratch']
  %s0 = inlined_call_operand.vmem [shape: s32[16,1], index: 0, kind: input, shape index: {}]
  %s1 = inlined_call_operand.vmem [shape: f32[1,128], index: 1, kind: input, shape index: {}]
  %s2 = inlined_call_operand.hbm [shape: f32[128,128], index: 2, kind: input, shape index: {}]
  %s3 = inlined_call_operand.hbm [shape: f32[16,128], index: 3, kind: output, shape index: {}]
  %s4 = sld [smem:[#allocation0]]
  $region26: #{tpu_custom_call.1} parent=0
    _
  %s6 = ssub.s32 1, %s4
  %s7 = scalar_select 0, %s6, %s4
  $region1: #{tpu_custom_call.1} parent=0
    #allocation2 [shape = 'u8[65536]{0}', space=vmem, size = 0x10000, scoped, tag = 'input window, operand 2, single buffered']
    #allocation3 [shape = 's32[1]{0}', space=sflag, size = 0x4, scoped, tag = 'scoped memory for tpu_custom_call.1']
    #allocation4 [shape = 's32[1]{0}', space=sflag, size = 0x4, scoped, tag = 'scoped memory for tpu_custom_call.1']
    #allocation5 [shape = 'u8[8192]{0}', space=vmem, size = 0x2000, scoped, tag = 'output window, operand 0, single buffered']
    %8 = vsyncpa [#allocation3], 0
    %9 = vsyncpa [#allocation4], 0
    // Predicated region
    $region2: #{tpu_custom_call.1} parent=1 // pred_check
      _
    $region3: #{tpu_custom_call.1} parent=1 // pred_check_branch
      %11 = sbr.rel (0) target = $region5
    $region4: #{tpu_custom_call.1} parent=1 // pred_region
      _
    $region5: #{tpu_custom_call.1} parent=1 // pred_fallthru
      _
    // Predicated region
    $region6: #{tpu_custom_call.1} parent=1 // pred_check
      _
    $region7: #{tpu_custom_call.1} parent=1 // pred_check_branch
      %13 = sbr.rel (0) target = $region9
    $region8: #{tpu_custom_call.1} parent=1 // pred_region
      _
    $region9: #{tpu_custom_call.1} parent=1 // pred_fallthru
      _
    // Predicated region
    $region10: #{tpu_custom_call.1} parent=1 // pred_check
      _
    $region11: #{tpu_custom_call.1} parent=1 // pred_check_branch
      %15 = sbr.rel (0) target = $region13
    $region12: #{tpu_custom_call.1} parent=1 // pred_region
      %17 = vsyncadd [#allocation3], 0
      %s18 = sshll.u32 %s2, 4
      %s19 = int_to_ptr.hbm [resolvable:$true] %s18
      %s20 = sshll.u32 [#allocation2], 4
      %s21 = int_to_ptr.vmem [resolvable:$true] %s20
      %26 = dma.hbm_to_vmem [thread:$0]  %s19, 2048, %s21, [#allocation3], 128, 128, 8
    $region13: #{tpu_custom_call.1} parent=1 // pred_fallthru
      _
    // Predicated region
    $region14: #{tpu_custom_call.1} parent=1 // pred_check
      _
    $region15: #{tpu_custom_call.1} parent=1 // pred_check_branch
      %28 = sbr.rel (0) target = $region17
    $region16: #{tpu_custom_call.1} parent=1 // pred_region
      %30 = dma.done [#allocation3], 2048
    $region17: #{tpu_custom_call.1} parent=1 // pred_fallthru
      _
    %v31 = vld [vmem:[%s0] sm:$0xff]
    %v32 = vld [vmem:[%s0 + $0x8] sm:$0xff]
    %v33 = vlaneseq
    %v34 = vand.u32 %v33, 127
    %35 = vset.pattern.permute.xlu0 0
    %36 = vperm.xlu0 %35, %v31
    %v37 = vpop.permute.xlu0 %36
    %38 = vset.pattern.permute.xlu0 0
    %39 = vperm.xlu0 %38, %v32
    %v40 = vpop.permute.xlu0 %39
    %vm41 = vcmp.eq.s32.totalorder %v34, %v37
    %vm42 = vcmp.eq.s32.totalorder %v34, %v40
    %v43 = vld [vmem:[%s1] sm:$0x1]
    %v45 = vperm.slane %v43, 0
    %v47 = vsel %vm41, %v45, 0.0
    %v48 = vsel %vm42, %v45, 0.0
    %v49 = vld [vmem:[#allocation2] sm:$0xff]
    %v50 = vld [vmem:[#allocation2 + $0x8] sm:$0xff]
    %v51 = vld [vmem:[#allocation2 + $0x10] sm:$0xff]
    %v52 = vld [vmem:[#allocation2 + $0x18] sm:$0xff]
    %v53 = vld [vmem:[#allocation2 + $0x20] sm:$0xff]
    %v54 = vld [vmem:[#allocation2 + $0x28] sm:$0xff]
    %v55 = vld [vmem:[#allocation2 + $0x30] sm:$0xff]
    %v56 = vld [vmem:[#allocation2 + $0x38] sm:$0xff]
    %v57 = vld [vmem:[#allocation2 + $0x40] sm:$0xff]
    %v58 = vld [vmem:[#allocation2 + $0x48] sm:$0xff]
    %v59 = vld [vmem:[#allocation2 + $0x50] sm:$0xff]
    %v60 = vld [vmem:[#allocation2 + $0x58] sm:$0xff]
    %v61 = vld [vmem:[#allocation2 + $0x60] sm:$0xff]
    %v62 = vld [vmem:[#allocation2 + $0x68] sm:$0xff]
    %v63 = vld [vmem:[#allocation2 + $0x70] sm:$0xff]
    %v64 = vld [vmem:[#allocation2 + $0x78] sm:$0xff]
    %v65 = vand.u32 %v64, 4294901760
    %66 = vmatpush.msra.mxu0 %v65
    %v67 = vand.u32 %v63, 4294901760
    %68 = vmatpush.msra.mxu0 %v67
    %v69 = vand.u32 %v62, 4294901760
    %70 = vmatpush.msra.mxu0 %v69
    %v71 = vand.u32 %v61, 4294901760
    %72 = vmatpush.msra.mxu0 %v71
    %v73 = vand.u32 %v60, 4294901760
    %74 = vmatpush.msra.mxu0 %v73
    %v75 = vand.u32 %v59, 4294901760
    %76 = vmatpush.msra.mxu0 %v75
    %v77 = vand.u32 %v58, 4294901760
    %78 = vmatpush.msra.mxu0 %v77
    %v79 = vand.u32 %v57, 4294901760
    %80 = vmatpush.msra.mxu0 %v79
    %v81 = vand.u32 %v56, 4294901760
    %82 = vmatpush.msra.mxu0 %v81
    %v83 = vand.u32 %v55, 4294901760
    %84 = vmatpush.msra.mxu0 %v83
    %v85 = vand.u32 %v54, 4294901760
    %86 = vmatpush.msra.mxu0 %v85
    %v87 = vand.u32 %v53, 4294901760
    %88 = vmatpush.msra.mxu0 %v87
    %v89 = vand.u32 %v52, 4294901760
    %90 = vmatpush.msra.mxu0 %v89
    %v91 = vand.u32 %v51, 4294901760
    %92 = vmatpush.msra.mxu0 %v91
    %v93 = vand.u32 %v50, 4294901760
    %94 = vmatpush.msra.mxu0 %v93
    %v95 = vand.u32 %v49, 4294901760
    %96 = vmatpush.msra.mxu0 %v95
    %v97 = vand.u32 %v47, 4294901760
    %v98 = vsub.f32 %v47, %v97
    %v99 = vand.u32 %v98, 4294901760
    %v100 = vsub.f32 %v98, %v99
    %v101 = vand.u32 %v100, 4294901760
    %102 = vmatmul.f32.gmra.mxu0 %v101
    %v103 = vpop.f32.mrf.mxu0
    %v104 = vadd.f32 0.0, %v103
    %v105 = vand.u32 %v48, 4294901760
    %v106 = vsub.f32 %v48, %v105
    %v107 = vand.u32 %v106, 4294901760
    %v108 = vsub.f32 %v106, %v107
    %v109 = vand.u32 %v108, 4294901760
    %110 = vmatmul.f32.gmra.mxu0 %v109
    %v111 = vpop.f32.mrf.mxu0
    %v112 = vadd.f32 0.0, %v111
    %113 = vdwg.mxu0
    %v114 = vand.u32 %v64, 4294901760
    %v115 = vsub.f32 %v64, %v114
    %v116 = vand.u32 %v115, 4294901760
    %v117 = vsub.f32 %v115, %v116
    %v118 = vand.u32 %v117, 4294901760
    %119 = vmatpush.msra.mxu0 %v118
    %v120 = vand.u32 %v63, 4294901760
    %v121 = vsub.f32 %v63, %v120
    %v122 = vand.u32 %v121, 4294901760
    %v123 = vsub.f32 %v121, %v122
    %v124 = vand.u32 %v123, 4294901760
    %125 = vmatpush.msra.mxu0 %v124
    %v126 = vand.u32 %v62, 4294901760
    %v127 = vsub.f32 %v62, %v126
    %v128 = vand.u32 %v127, 4294901760
    %v129 = vsub.f32 %v127, %v128
    %v130 = vand.u32 %v129, 4294901760
    %131 = vmatpush.msra.mxu0 %v130
    %v132 = vand.u32 %v61, 4294901760
    %v133 = vsub.f32 %v61, %v132
    %v134 = vand.u32 %v133, 4294901760
    %v135 = vsub.f32 %v133, %v134
    %v136 = vand.u32 %v135, 4294901760
    %137 = vmatpush.msra.mxu0 %v136
    %v138 = vand.u32 %v60, 4294901760
    %v139 = vsub.f32 %v60, %v138
    %v140 = vand.u32 %v139, 4294901760
    %v141 = vsub.f32 %v139, %v140
    %v142 = vand.u32 %v141, 4294901760
    %143 = vmatpush.msra.mxu0 %v142
    %v144 = vand.u32 %v59, 4294901760
    %v145 = vsub.f32 %v59, %v144
    %v146 = vand.u32 %v145, 4294901760
    %v147 = vsub.f32 %v145, %v146
    %v148 = vand.u32 %v147, 4294901760
    %149 = vmatpush.msra.mxu0 %v148
    %v150 = vand.u32 %v58, 4294901760
    %v151 = vsub.f32 %v58, %v150
    %v152 = vand.u32 %v151, 4294901760
    %v153 = vsub.f32 %v151, %v152
    %v154 = vand.u32 %v153, 4294901760
    %155 = vmatpush.msra.mxu0 %v154
    %v156 = vand.u32 %v57, 4294901760
    %v157 = vsub.f32 %v57, %v156
    %v158 = vand.u32 %v157, 4294901760
    %v159 = vsub.f32 %v157, %v158
    %v160 = vand.u32 %v159, 4294901760
    %161 = vmatpush.msra.mxu0 %v160
    %v162 = vand.u32 %v56, 4294901760
    %v163 = vsub.f32 %v56, %v162
    %v164 = vand.u32 %v163, 4294901760
    %v165 = vsub.f32 %v163, %v164
    %v166 = vand.u32 %v165, 4294901760
    %167 = vmatpush.msra.mxu0 %v166
    %v168 = vand.u32 %v55, 4294901760
    %v169 = vsub.f32 %v55, %v168
    %v170 = vand.u32 %v169, 4294901760
    %v171 = vsub.f32 %v169, %v170
    %v172 = vand.u32 %v171, 4294901760
    %173 = vmatpush.msra.mxu0 %v172
    %v174 = vand.u32 %v54, 4294901760
    %v175 = vsub.f32 %v54, %v174
    %v176 = vand.u32 %v175, 4294901760
    %v177 = vsub.f32 %v175, %v176
    %v178 = vand.u32 %v177, 4294901760
    %179 = vmatpush.msra.mxu0 %v178
    %v180 = vand.u32 %v53, 4294901760
    %v181 = vsub.f32 %v53, %v180
    %v182 = vand.u32 %v181, 4294901760
    %v183 = vsub.f32 %v181, %v182
    %v184 = vand.u32 %v183, 4294901760
    %185 = vmatpush.msra.mxu0 %v184
    %v186 = vand.u32 %v52, 4294901760
    %v187 = vsub.f32 %v52, %v186
    %v188 = vand.u32 %v187, 4294901760
    %v189 = vsub.f32 %v187, %v188
    %v190 = vand.u32 %v189, 4294901760
    %191 = vmatpush.msra.mxu0 %v190
    %v192 = vand.u32 %v51, 4294901760
    %v193 = vsub.f32 %v51, %v192
    %v194 = vand.u32 %v193, 4294901760
    %v195 = vsub.f32 %v193, %v194
    %v196 = vand.u32 %v195, 4294901760
    %197 = vmatpush.msra.mxu0 %v196
    %v198 = vand.u32 %v50, 4294901760
    %v199 = vsub.f32 %v50, %v198
    %v200 = vand.u32 %v199, 4294901760
    %v201 = vsub.f32 %v199, %v200
    %v202 = vand.u32 %v201, 4294901760
    %203 = vmatpush.msra.mxu0 %v202
    %v204 = vand.u32 %v49, 4294901760
    %v205 = vsub.f32 %v49, %v204
    %v206 = vand.u32 %v205, 4294901760
    %v207 = vsub.f32 %v205, %v206
    %v208 = vand.u32 %v207, 4294901760
    %209 = vmatpush.msra.mxu0 %v208
    %v210 = vand.u32 %v47, 4294901760
    %211 = vmatmul.f32.gmra.mxu0 %v210
    %v212 = vpop.f32.mrf.mxu0
    %v213 = vadd.f32 %v104, %v212
    %v214 = vand.u32 %v48, 4294901760
    %215 = vmatmul.f32.gmra.mxu0 %v214
    %v216 = vpop.f32.mrf.mxu0
    %v217 = vadd.f32 %v112, %v216
    %218 = vdwg.mxu0
    %v219 = vand.u32 %v64, 4294901760
    %v220 = vsub.f32 %v64, %v219
    %221 = vmatpush.msra.mxu0 %v220
    %v222 = vand.u32 %v63, 4294901760
    %v223 = vsub.f32 %v63, %v222
    %224 = vmatpush.msra.mxu0 %v223
    %v225 = vand.u32 %v62, 4294901760
    %v226 = vsub.f32 %v62, %v225
    %227 = vmatpush.msra.mxu0 %v226
    %v228 = vand.u32 %v61, 4294901760
    %v229 = vsub.f32 %v61, %v228
    %230 = vmatpush.msra.mxu0 %v229
    %v231 = vand.u32 %v60, 4294901760
    %v232 = vsub.f32 %v60, %v231
    %233 = vmatpush.msra.mxu0 %v232
    %v234 = vand.u32 %v59, 4294901760
    %v235 = vsub.f32 %v59, %v234
    %236 = vmatpush.msra.mxu0 %v235
    %v237 = vand.u32 %v58, 4294901760
    %v238 = vsub.f32 %v58, %v237
    %239 = vmatpush.msra.mxu0 %v238
    %v240 = vand.u32 %v57, 4294901760
    %v241 = vsub.f32 %v57, %v240
    %242 = vmatpush.msra.mxu0 %v241
    %v243 = vand.u32 %v56, 4294901760
    %v244 = vsub.f32 %v56, %v243
    %245 = vmatpush.msra.mxu0 %v244
    %v246 = vand.u32 %v55, 4294901760
    %v247 = vsub.f32 %v55, %v246
    %248 = vmatpush.msra.mxu0 %v247
    %v249 = vand.u32 %v54, 4294901760
    %v250 = vsub.f32 %v54, %v249
    %251 = vmatpush.msra.mxu0 %v250
    %v252 = vand.u32 %v53, 4294901760
    %v253 = vsub.f32 %v53, %v252
    %254 = vmatpush.msra.mxu0 %v253
    %v255 = vand.u32 %v52, 4294901760
    %v256 = vsub.f32 %v52, %v255
    %257 = vmatpush.msra.mxu0 %v256
    %v258 = vand.u32 %v51, 4294901760
    %v259 = vsub.f32 %v51, %v258
    %260 = vmatpush.msra.mxu0 %v259
    %v261 = vand.u32 %v50, 4294901760
    %v262 = vsub.f32 %v50, %v261
    %263 = vmatpush.msra.mxu0 %v262
    %v264 = vand.u32 %v49, 4294901760
    %v265 = vsub.f32 %v49, %v264
    %266 = vmatpush.msra.mxu0 %v265
    %v267 = vand.u32 %v47, 4294901760
    %v268 = vsub.f32 %v47, %v267
    %269 = vmatmul.f32.gmra.mxu0 %v268
    %v270 = vpop.f32.mrf.mxu0
    %v271 = vadd.f32 %v213, %v270
    %v272 = vand.u32 %v48, 4294901760
    %v273 = vsub.f32 %v48, %v272
    %274 = vmatmul.f32.gmra.mxu0 %v273
    %v275 = vpop.f32.mrf.mxu0
    %v276 = vadd.f32 %v217, %v275
    %277 = vdwg.mxu0
    %v278 = vand.u32 %v64, 4294901760
    %279 = vmatpush.msra.mxu0 %v278
    %v280 = vand.u32 %v63, 4294901760
    %281 = vmatpush.msra.mxu0 %v280
    %v282 = vand.u32 %v62, 4294901760
    %283 = vmatpush.msra.mxu0 %v282
    %v284 = vand.u32 %v61, 4294901760
    %285 = vmatpush.msra.mxu0 %v284
    %v286 = vand.u32 %v60, 4294901760
    %287 = vmatpush.msra.mxu0 %v286
    %v288 = vand.u32 %v59, 4294901760
    %289 = vmatpush.msra.mxu0 %v288
    %v290 = vand.u32 %v58, 4294901760
    %291 = vmatpush.msra.mxu0 %v290
    %v292 = vand.u32 %v57, 4294901760
    %293 = vmatpush.msra.mxu0 %v292
    %v294 = vand.u32 %v56, 4294901760
    %295 = vmatpush.msra.mxu0 %v294
    %v296 = vand.u32 %v55, 4294901760
    %297 = vmatpush.msra.mxu0 %v296
    %v298 = vand.u32 %v54, 4294901760
    %299 = vmatpush.msra.mxu0 %v298
    %v300 = vand.u32 %v53, 4294901760
    %301 = vmatpush.msra.mxu0 %v300
    %v302 = vand.u32 %v52, 4294901760
    %303 = vmatpush.msra.mxu0 %v302
    %v304 = vand.u32 %v51, 4294901760
    %305 = vmatpush.msra.mxu0 %v304
    %v306 = vand.u32 %v50, 4294901760
    %307 = vmatpush.msra.mxu0 %v306
    %v308 = vand.u32 %v49, 4294901760
    %309 = vmatpush.msra.mxu0 %v308
    %v310 = vand.u32 %v47, 4294901760
    %v311 = vsub.f32 %v47, %v310
    %v312 = vand.u32 %v311, 4294901760
    %313 = vmatmul.f32.gmra.mxu0 %v312
    %v314 = vpop.f32.mrf.mxu0
    %v315 = vadd.f32 %v271, %v314
    %v316 = vand.u32 %v48, 4294901760
    %v317 = vsub.f32 %v48, %v316
    %v318 = vand.u32 %v317, 4294901760
    %319 = vmatmul.f32.gmra.mxu0 %v318
    %v320 = vpop.f32.mrf.mxu0
    %v321 = vadd.f32 %v276, %v320
    %322 = vdwg.mxu0
    %v323 = vand.u32 %v64, 4294901760
    %v324 = vsub.f32 %v64, %v323
    %v325 = vand.u32 %v324, 4294901760
    %326 = vmatpush.msra.mxu0 %v325
    %v327 = vand.u32 %v63, 4294901760
    %v328 = vsub.f32 %v63, %v327
    %v329 = vand.u32 %v328, 4294901760
    %330 = vmatpush.msra.mxu0 %v329
    %v331 = vand.u32 %v62, 4294901760
    %v332 = vsub.f32 %v62, %v331
    %v333 = vand.u32 %v332, 4294901760
    %334 = vmatpush.msra.mxu0 %v333
    %v335 = vand.u32 %v61, 4294901760
    %v336 = vsub.f32 %v61, %v335
    %v337 = vand.u32 %v336, 4294901760
    %338 = vmatpush.msra.mxu0 %v337
    %v339 = vand.u32 %v60, 4294901760
    %v340 = vsub.f32 %v60, %v339
    %v341 = vand.u32 %v340, 4294901760
    %342 = vmatpush.msra.mxu0 %v341
    %v343 = vand.u32 %v59, 4294901760
    %v344 = vsub.f32 %v59, %v343
    %v345 = vand.u32 %v344, 4294901760
    %346 = vmatpush.msra.mxu0 %v345
    %v347 = vand.u32 %v58, 4294901760
    %v348 = vsub.f32 %v58, %v347
    %v349 = vand.u32 %v348, 4294901760
    %350 = vmatpush.msra.mxu0 %v349
    %v351 = vand.u32 %v57, 4294901760
    %v352 = vsub.f32 %v57, %v351
    %v353 = vand.u32 %v352, 4294901760
    %354 = vmatpush.msra.mxu0 %v353
    %v355 = vand.u32 %v56, 4294901760
    %v356 = vsub.f32 %v56, %v355
    %v357 = vand.u32 %v356, 4294901760
    %358 = vmatpush.msra.mxu0 %v357
    %v359 = vand.u32 %v55, 4294901760
    %v360 = vsub.f32 %v55, %v359
    %v361 = vand.u32 %v360, 4294901760
    %362 = vmatpush.msra.mxu0 %v361
    %v363 = vand.u32 %v54, 4294901760
    %v364 = vsub.f32 %v54, %v363
    %v365 = vand.u32 %v364, 4294901760
    %366 = vmatpush.msra.mxu0 %v365
    %v367 = vand.u32 %v53, 4294901760
    %v368 = vsub.f32 %v53, %v367
    %v369 = vand.u32 %v368, 4294901760
    %370 = vmatpush.msra.mxu0 %v369
    %v371 = vand.u32 %v52, 4294901760
    %v372 = vsub.f32 %v52, %v371
    %v373 = vand.u32 %v372, 4294901760
    %374 = vmatpush.msra.mxu0 %v373
    %v375 = vand.u32 %v51, 4294901760
    %v376 = vsub.f32 %v51, %v375
    %v377 = vand.u32 %v376, 4294901760
    %378 = vmatpush.msra.mxu0 %v377
    %v379 = vand.u32 %v50, 4294901760
    %v380 = vsub.f32 %v50, %v379
    %v381 = vand.u32 %v380, 4294901760
    %382 = vmatpush.msra.mxu0 %v381
    %v383 = vand.u32 %v49, 4294901760
    %v384 = vsub.f32 %v49, %v383
    %v385 = vand.u32 %v384, 4294901760
    %386 = vmatpush.msra.mxu0 %v385
    %v387 = vand.u32 %v47, 4294901760
    %388 = vmatmul.f32.gmra.mxu0 %v387
    %v389 = vpop.f32.mrf.mxu0
    %v390 = vadd.f32 %v315, %v389
    %v391 = vand.u32 %v48, 4294901760
    %392 = vmatmul.f32.gmra.mxu0 %v391
    %v393 = vpop.f32.mrf.mxu0
    %v394 = vadd.f32 %v321, %v393
    %395 = vdwg.mxu0
    %v396 = vand.u32 %v64, 4294901760
    %397 = vmatpush.msra.mxu0 %v396
    %v398 = vand.u32 %v63, 4294901760
    %399 = vmatpush.msra.mxu0 %v398
    %v400 = vand.u32 %v62, 4294901760
    %401 = vmatpush.msra.mxu0 %v400
    %v402 = vand.u32 %v61, 4294901760
    %403 = vmatpush.msra.mxu0 %v402
    %v404 = vand.u32 %v60, 4294901760
    %405 = vmatpush.msra.mxu0 %v404
    %v406 = vand.u32 %v59, 4294901760
    %407 = vmatpush.msra.mxu0 %v406
    %v408 = vand.u32 %v58, 4294901760
    %409 = vmatpush.msra.mxu0 %v408
    %v410 = vand.u32 %v57, 4294901760
    %411 = vmatpush.msra.mxu0 %v410
    %v412 = vand.u32 %v56, 4294901760
    %413 = vmatpush.msra.mxu0 %v412
    %v414 = vand.u32 %v55, 4294901760
    %415 = vmatpush.msra.mxu0 %v414
    %v416 = vand.u32 %v54, 4294901760
    %417 = vmatpush.msra.mxu0 %v416
    %v418 = vand.u32 %v53, 4294901760
    %419 = vmatpush.msra.mxu0 %v418
    %v420 = vand.u32 %v52, 4294901760
    %421 = vmatpush.msra.mxu0 %v420
    %v422 = vand.u32 %v51, 4294901760
    %423 = vmatpush.msra.mxu0 %v422
    %v424 = vand.u32 %v50, 4294901760
    %425 = vmatpush.msra.mxu0 %v424
    %v426 = vand.u32 %v49, 4294901760
    %427 = vmatpush.msra.mxu0 %v426
    %v428 = vand.u32 %v47, 4294901760
    %429 = vmatmul.f32.gmra.mxu0 %v428
    %v430 = vpop.f32.mrf.mxu0
    %v431 = vadd.f32 %v390, %v430
    %v432 = vand.u32 %v48, 4294901760
    %433 = vmatmul.f32.gmra.mxu0 %v432
    %v434 = vpop.f32.mrf.mxu0
    %v435 = vadd.f32 %v394, %v434
    %436 = vdwg.mxu0
    %437 = vst [vmem:[#allocation5] sm:$0xff] %v431
    %438 = vst [vmem:[#allocation5 + $0x8] sm:$0xff] %v435
    // Predicated region
    $region18: #{tpu_custom_call.1} parent=1 // pred_check
      _
    $region19: #{tpu_custom_call.1} parent=1 // pred_check_branch
      %440 = sbr.rel (0) target = $region21
    $region20: #{tpu_custom_call.1} parent=1 // pred_region
      %442 = vsyncadd [#allocation4], 0
      %s443 = sshll.u32 [#allocation5], 4
      %s444 = int_to_ptr.vmem [resolvable:$true] %s443
      %s445 = sshll.u32 %s3, 4
      %s446 = int_to_ptr.hbm [resolvable:$true] %s445
      %451 = dma.vmem_to_hbm [thread:$0]  %s444, 256, %s446, [#allocation4], 128, 128, 8
    $region21: #{tpu_custom_call.1} parent=1 // pred_fallthru
      _
    // Predicated region
    $region22: #{tpu_custom_call.1} parent=1 // pred_check
      _
    $region23: #{tpu_custom_call.1} parent=1 // pred_check_branch
      %453 = sbr.rel (0) target = $region25
    $region24: #{tpu_custom_call.1} parent=1 // pred_region
      %455 = dma.done [#allocation4], 256
    $region25: #{tpu_custom_call.1} parent=1 // pred_fallthru
      _
    %456 = vsyncpa [#allocation3], 1
    %457 = vsyncpa [#allocation4], 1

</llo_original>
